<compile_context>
chip_gen: v5e
topology: v5e:2x2
jax: 0.10.0
libtpu: 0.0.40
codegen_flags: <defaults>
</compile_context>

<pallas_src>
import jax
import jax.numpy as jnp
from jax.experimental import pallas as pl
from jax.experimental.pallas import tpu as pltpu


def _conv1x1_kernel(w_ref, x_ref, o_ref):
    # w_ref: (CP, CP) channel-mixing weight, resident in VMEM across the grid.
    # x_ref / o_ref: (bn, CP, tile_hw) lane-dense pixel tiles for bn batch elements.
    w = w_ref[...]
    # bn is a small static Python int -> cheap unroll; each iteration is a tiny
    # (CP, CP) @ (CP, tile_hw) matmul whose output layout matches o_ref directly
    # (no in-kernel transpose).
    for b in range(x_ref.shape[0]):
        o_ref[b, :, :] = jnp.dot(
            w, x_ref[b, :, :], preferred_element_type=jnp.float32
        ).astype(o_ref.dtype)


def _conv1x1_pallas(x3, weight, *, max_tile_hw=32768, max_bn=8):
    """x3: (N, CP, HWp); weight: (CP, CP). Returns z3 with z3[n] = weight @ x3[n]."""
    N, CP, HWp = x3.shape
    weight = weight.astype(x3.dtype)

    # Lane-dense pixel tile: multiple of 128.  At CP=8 f32 and tile_hw=32768 each
    # grid step moves ~1 MiB in + ~1 MiB out (>= the ~1 MB/step needed to hide the
    # fixed per-step cost even at v7x's 3.2 TB/s), while double-buffered in+out
    # tiles total ~4 MiB -> safely under the 16 MiB scoped-VMEM default on v5e.
    tile_hw = min(max_tile_hw, pl.cdiv(HWp, 128) * 128)
    # Ragged grid: Pallas pads OOB reads and masks OOB writes on the last tile.
    n_hw = pl.cdiv(HWp, tile_hw)

    # If a single image's pixels fit in one (small) tile, block the batch dim too so
    # per-step data volume stays high; but keep >= 2 grid steps when N allows it so
    # both v7x TensorCores get work ("parallel" axes below).
    bn = 1
    if n_hw == 1 and N > 1:
        bn = max(1, min(N, max_bn, max_tile_hw // tile_hw))
        while bn > 1 and pl.cdiv(N, bn) < 2:
            bn = max(1, bn // 2)
    n_b = pl.cdiv(N, bn)

    return pl.pallas_call(
        _conv1x1_kernel,
        out_shape=jax.ShapeDtypeStruct((N, CP, HWp), x3.dtype),
        grid_spec=pltpu.PrefetchScalarGridSpec(
            num_scalar_prefetch=0,
            grid=(n_b, n_hw),
            in_specs=[
                # Constant block index -> weight stays resident in VMEM.
                pl.BlockSpec((CP, CP), lambda nb, t: (0, 0)),
                pl.BlockSpec((bn, CP, tile_hw), lambda nb, t: (nb, 0, t)),
            ],
            out_specs=pl.BlockSpec((bn, CP, tile_hw), lambda nb, t: (nb, 0, t)),
        ),
        compiler_params=pltpu.CompilerParams(
            # Both axes independent -> megacore sharding on v7x; no-op on v5e/v6e.
            dimension_semantics=("parallel", "parallel"),
        ),
    )(weight, x3)


class InvertibleConv1x1:
    """JAX/Pallas port of the PyTorch InvertibleConv1x1 flow layer (forward pass)."""

    def __init__(self, n_channels, key):
        self.n_channels = n_channels
        # Faithful to torch: qr(rand(C, C))[0]  (uniform init, then QR -> orthogonal).
        w_rand = jax.random.uniform(key, (n_channels, n_channels), dtype=jnp.float32)
        self.weight = jnp.linalg.qr(w_rand)[0].astype(jnp.float32)
        self._refresh_weight_cache()

    def _refresh_weight_cache(self):
        # Hoisted out of the per-call path: recomputed only when the weight changes.
        self._logabsdet = jnp.linalg.slogdet(self.weight)[1]
        # TODO(synk): for very deep flows prefer an LU/solve-based inverse over inv().
        self._weight_inv = jnp.linalg.inv(self.weight)

    def get_weight(self, x, reverse):
        pixels = x.shape[2] * x.shape[3]
        dlogdet = self._logabsdet * pixels
        weight = self.weight if not reverse else self._weight_inv
        return weight, dlogdet

    def __call__(self, x, logdet=None, reverse=False, conditional_features=None):
        # x: (N, C, H, W) float32
        weight, dlogdet = self.get_weight(x, reverse)
        N, C, H, W = x.shape
        HW = H * W

        # Pack channels up to the full 8 f32 sublanes when possible: each channel's
        # contiguous pixel row is split into `pack` chunks (free reshape in NCHW) and
        # the matching weight is kron(W, I_pack), so z[n] = kron(W,I) @ x_packed[n]
        # reproduces the 1x1 conv exactly.
        pack = 1
        if C < 8 and 8 % C == 0 and HW % (8 // C) == 0:
            pack = 8 // C
        if pack > 1:
            x3 = x.reshape(N, C * pack, HW // pack)
            w_eff = jnp.kron(weight, jnp.eye(pack, dtype=weight.dtype))
        else:
            x3 = x.reshape(N, C, HW)
            w_eff = weight

        z3 = _conv1x1_pallas(x3, w_eff)
        z = z3.reshape(N, C, H, W)

        if logdet is not None:
            logdet = logdet + (dlogdet if not reverse else -dlogdet)
        return z, logdet


if __name__ == "__main__":
    key = jax.random.PRNGKey(0)
    k_w, k_x = jax.random.split(key)

    n, c, h, w = 2, 4, 16, 16
    layer = InvertibleConv1x1(c, k_w)
    x = jax.random.normal(k_x, (n, c, h, w), dtype=jnp.float32)
    logdet0 = jnp.zeros((), dtype=jnp.float32)

    # Forward
    z, logdet = layer(x, logdet=logdet0, reverse=False)
    z = jax.block_until_ready(z)
    logdet = jax.block_until_ready(logdet)

    # Reference check against plain-JAX 1x1-conv semantics.
    z_ref = jnp.einsum("oc,nchw->nohw", layer.weight, x)
    assert z.shape == (n, c, h, w)
    assert jnp.allclose(z, z_ref, atol=1e-5), "forward mismatch vs reference"

    # Reverse path round-trips (same kernel, cached W^{-1}).
    x_rec, logdet_rt = layer(z, logdet=logdet, reverse=True)
    x_rec = jax.block_until_ready(x_rec)
    assert jnp.allclose(x_rec, x, atol=1e-4), "reverse does not invert forward"
    assert jnp.allclose(logdet_rt, logdet0, atol=1e-3), "logdet did not cancel"

    # Ragged-grid check (odd HW -> unpacked path, tile 128 > 81 pixels): confirms
    # OOB reads/writes are handled by Pallas with no host-side pad / slice.
    x_odd = jax.random.normal(jax.random.PRNGKey(1), (1, c, 9, 9), dtype=jnp.float32)
    z_odd, _ = layer(x_odd, logdet=None, reverse=False)
    z_odd = jax.block_until_ready(z_odd)
    assert jnp.allclose(
        z_odd, jnp.einsum("oc,nchw->nohw", layer.weight, x_odd), atol=1e-5
    ), "ragged (unpacked) mismatch"

    # Ragged + packed check (even HW not tile-aligned after packing: 150 -> 75 < 128).
    x_rag = jax.random.normal(jax.random.PRNGKey(2), (2, c, 10, 15), dtype=jnp.float32)
    z_rag, _ = layer(x_rag, logdet=None, reverse=False)
    z_rag = jax.block_until_ready(z_rag)
    assert jnp.allclose(
        z_rag, jnp.einsum("oc,nchw->nohw", layer.weight, x_rag), atol=1e-5
    ), "ragged (packed) mismatch"

    print("KERNEL_OK")
</pallas_src>

<mosaic_0001>
module attributes {stable_mosaic.version = 11 : i64} {
  func.func @_conv1x1_kernel(%arg0: i32, %arg1: i32, %arg2: memref<8x8xf32, #tpu.memory_space<vmem>>, %arg3: memref<1x8x128xf32, #tpu.memory_space<vmem>>, %arg4: memref<1x8x128xf32, #tpu.memory_space<vmem>>) attributes {dimension_semantics = [#tpu.dimension_semantics<parallel>, #tpu.dimension_semantics<parallel>], iteration_bounds = array<i64: 2, 1>, scalar_prefetch = 0 : i64, scratch_operands = 0 : i64, tpu.core_type = #tpu.core_type<tc>, window_params = [{pipeline_mode = #tpu.pipeline_mode<synchronous>, transform_indices = @transform_0, window_bounds = array<i64: 8, 8>}, {transform_indices = @transform_1, window_bounds = array<i64: 1, 8, 128>}, {transform_indices = @transform_2, window_bounds = array<i64: 1, 8, 128>}]} {
    %c0 = arith.constant 0 : index
    %c0_0 = arith.constant 0 : index
    %0 = vector.load %arg2[%c0, %c0_0] : memref<8x8xf32, #tpu.memory_space<vmem>>, vector<8x8xf32>
    %c0_1 = arith.constant 0 : index
    %c0_2 = arith.constant 0 : index
    %c0_3 = arith.constant 0 : index
    %1 = vector.load %arg3[%c0_1, %c0_2, %c0_3] : memref<1x8x128xf32, #tpu.memory_space<vmem>>, vector<1x8x128xf32>
    %2 = vector.shape_cast %1 : vector<1x8x128xf32> to vector<8x128xf32>
    %cst = arith.constant dense<0.000000e+00> : vector<8x128xf32>
    %3 = tpu.matmul %0, %2, %cst {dimension_numbers = #tpu.dot_dimension_numbers<[1], [0], [0], [1], [0, 0, 1, 1], [], []>} : vector<8x8xf32>, vector<8x128xf32>, vector<8x128xf32> -> vector<8x128xf32>
    %c0_4 = arith.constant 0 : index
    %c0_5 = arith.constant 0 : index
    %c0_6 = arith.constant 0 : index
    %4 = vector.load %arg4[%c0_4, %c0_5, %c0_6] : memref<1x8x128xf32, #tpu.memory_space<vmem>>, vector<1x8x128xf32>
    %5 = vector.shape_cast %4 : vector<1x8x128xf32> to vector<8x128xf32>
    %6 = vector.shape_cast %3 : vector<8x128xf32> to vector<1x8x128xf32>
    tpu.vector_store %arg4[%c0_4, %c0_5, %c0_6], %6 {strides = array<i32>} : memref<1x8x128xf32, #tpu.memory_space<vmem>>, vector<1x8x128xf32>,
    return
  }
  func.func @transform_0(%arg0: i32, %arg1: i32) -> (i32, i32) {
    %c0_i32 = arith.constant 0 : i32
    %c0_i32_0 = arith.constant 0 : i32
    %c0_i32_1 = arith.constant 0 : i32
    return %c0_i32, %c0_i32_0 : i32, i32
  }
  func.func @transform_1(%arg0: i32, %arg1: i32) -> (i32, i32, i32) {
    %c0_i32 = arith.constant 0 : i32
    %c0_i32_0 = arith.constant 0 : i32
    return %arg0, %c0_i32, %arg1 : i32, i32, i32
  }
  func.func @transform_2(%arg0: i32, %arg1: i32) -> (i32, i32, i32) {
    %c0_i32 = arith.constant 0 : i32
    %c0_i32_0 = arith.constant 0 : i32
    return %arg0, %c0_i32, %arg1 : i32, i32, i32
  }
}

</mosaic_0001>

<llo_original>
// kernel: tpu_custom_call.1
$region0: #{tpu_custom_call.1}
  #allocation0 [shape = 'u32[]', space=smem, size = 0x4, offset = 0x4, fixed_abs, tag = 'smem constant byte address 0x4 - core index']
  #allocation1 [shape = 'u32[72,128]{1,0:T(1,128)}', space=vmem, size = 0x9000, scoped, tag = 'internal scratch']
  %s0 = inlined_call_operand.hbm [shape: f32[8,8], index: 0, kind: input, shape index: {}]
  %s1 = inlined_call_operand.hbm [shape: f32[2,8,128], index: 1, kind: input, shape index: {}]
  %s2 = inlined_call_operand.hbm [shape: f32[2,8,128], index: 2, kind: output, shape index: {}]
  %s3 = sld [smem:[#allocation0]]
  $region49: #{tpu_custom_call.1} parent=0
    _
  %s5 = ssub.s32 1, %s3
  %s6 = scalar_select 0, %s5, %s3
  $region1: #{tpu_custom_call.1} parent=0
    #allocation2 [shape = 'u8[4096]{0}', space=vmem, size = 0x1000, scoped, tag = 'input window, operand 0, single buffered']
    #allocation3 [shape = 's32[2]{0}', space=sflag, size = 0x8, scoped, tag = 'scoped memory for tpu_custom_call.1']
    #allocation4 [shape = 's32[2]{0}', space=sflag, size = 0x8, scoped, tag = 'scoped memory for tpu_custom_call.1']
    #allocation5 [shape = 'u8[8192]{0}', space=vmem, size = 0x2000, scoped, tag = 'input window, operand 1']
    #allocation6 [shape = 's32[2]{0}', space=sflag, size = 0x8, scoped, tag = 'scoped memory for tpu_custom_call.1']
    #allocation7 [shape = 'u8[8192]{0}', space=vmem, size = 0x2000, scoped, tag = 'output window, operand 0']
    %7 = vsyncpa [#allocation3], 0
    %8 = vsyncpa [#allocation6], 0
    %s9 = scalar_lea.sflag [#allocation6], 1
    %10 = vsyncpa %s9, 0
    %11 = vsyncpa [#allocation4], 0
    %s12 = scalar_lea.sflag [#allocation4], 1
    %13 = vsyncpa %s12, 0
    loop: start=0, step=1, limit=4
    $region2: #{tpu_custom_call.1} parent=1 // loop_pre_header
      _
    $region3: #{tpu_custom_call.1} parent=1 // loop_header
      %s15 = sphi 0, %s19
      %p16 = scmp.ge.s32.totalorder %s15, 4
      %s22 = sphi 0, %s34
      %s23 = sphi 0, %s30
      %s24 = sphi 0, %s22
      %s25 = sphi 0, %s23
      %s26 = sphi 0, %s24
      %s27 = sphi 0, %s25
      %s35 = sphi 0, %s35
      %s37 = sphi 0, %s35
      %s38 = sphi 0, %s37
      %s52 = sphi 0, %s38
      %s60 = sphi 0, %s62
      %s63 = sphi 0, %s60
      %s64 = sphi 0, %s63
      %s80 = sphi 0, %s64
      %s88 = sphi 0, %s90
      %s91 = sphi 0, %s88
      %s92 = sphi 0, %s91
      %s108 = sphi 0, %s92
    $region4: #{tpu_custom_call.1} parent=1 // loop_header_branch
      %18 = sbr.rel (%p16) target = $region8
    $region5: #{tpu_custom_call.1} parent=1 // loop_body
      %s20 = ssub.s32 %s15, 1
      %s21 = ssub.s32 %s15, 2
      %s28 = sadd.s32 1, %s23
      %p29 = scmp.ge.s32.totalorder %s28, 1
      %s30 = scalar_select %p29, 0, %s28
      %s31 = sadd.s32 1, %s22
      %s32 = scalar_select %p29, %s31, %s22
      %p33 = scmp.ge.s32.totalorder %s32, 2
      %s34 = scalar_select %p33, 0, %s32
      %s36 = sadd.s32 %s35, 1
      %p39 = scmp.eq.s32.totalorder %s15, 1
      %p40 = scmp.ne.s32.totalorder %s35, %s37
      %p41 = scmp.eq.s32.totalorder %s15, 0
      %p42 = por %p40, %p41
      %p43 = scmp.ne.s32.totalorder %s35, %s37
      %p44 = scmp.eq.s32.totalorder %s20, 1
      %p45 = por %p43, %p44
      %p46 = scmp.ne.s32.totalorder %s37, %s38
      %p47 = scmp.eq.s32.totalorder %s20, 0
      %p48 = por %p46, %p47
      %p49 = scmp.ne.s32.totalorder %s37, %s38
      %p50 = scmp.eq.s32.totalorder %s21, 1
      %p51 = por %p49, %p50
      %p53 = scmp.ne.s32.totalorder %s38, %s52
      %p54 = scmp.eq.s32.totalorder %s21, 0
      %p55 = por %p53, %p54
      %s56 = ssub.s32 %s22, %s34
      %s57 = ssub.s32 %s23, %s30
      %s58 = sor.u32 %s56, %s57
      %p59 = scmp.eq.s32.totalorder %s58, 0
      %s61 = sadd.s32 %s60, 1
      %s62 = scalar_select %p59, %s60, %s61
      %p65 = pneg %p59
      %p66 = scmp.eq.s32.totalorder %s15, 1
      %p67 = por %p65, %p66
      %p68 = scmp.ne.s32.totalorder %s60, %s63
      %p69 = scmp.eq.s32.totalorder %s15, 0
      %p70 = por %p68, %p69
      %p71 = scmp.ne.s32.totalorder %s60, %s63
      %p72 = scmp.eq.s32.totalorder %s20, 1
      %p73 = por %p71, %p72
      %p74 = scmp.ne.s32.totalorder %s63, %s64
      %p75 = scmp.eq.s32.totalorder %s20, 0
      %p76 = por %p74, %p75
      %p77 = scmp.ne.s32.totalorder %s63, %s64
      %p78 = scmp.eq.s32.totalorder %s21, 1
      %p79 = por %p77, %p78
      %p81 = scmp.ne.s32.totalorder %s64, %s80
      %p82 = scmp.eq.s32.totalorder %s21, 0
      %p83 = por %p81, %p82
      %s84 = ssub.s32 %s22, %s34
      %s85 = ssub.s32 %s23, %s30
      %s86 = sor.u32 %s84, %s85
      %p87 = scmp.eq.s32.totalorder %s86, 0
      %s89 = sadd.s32 %s88, 1
      %s90 = scalar_select %p87, %s88, %s89
      %p93 = pneg %p87
      %p94 = scmp.eq.s32.totalorder %s15, 1
      %p95 = por %p93, %p94
      %p96 = scmp.ne.s32.totalorder %s88, %s91
      %p97 = scmp.eq.s32.totalorder %s15, 0
      %p98 = por %p96, %p97
      %p99 = scmp.ne.s32.totalorder %s88, %s91
      %p100 = scmp.eq.s32.totalorder %s20, 1
      %p101 = por %p99, %p100
      %p102 = scmp.ne.s32.totalorder %s91, %s92
      %p103 = scmp.eq.s32.totalorder %s20, 0
      %p104 = por %p102, %p103
      %p105 = scmp.ne.s32.totalorder %s91, %s92
      %p106 = scmp.eq.s32.totalorder %s21, 1
      %p107 = por %p105, %p106
      %p109 = scmp.ne.s32.totalorder %s92, %s108
      %p110 = scmp.eq.s32.totalorder %s21, 0
      %p111 = por %p109, %p110
      %p112 = scmp.le.s32.totalorder 1, %s15
      %p113 = scmp.lt.s32.totalorder %s15, 3
      %p114 = pnand %p112, %p113
      %p115 = pneg %p114
      // Predicated region
      $region9: #{tpu_custom_call.1} parent=5 // pred_check
        _
      $region10: #{tpu_custom_call.1} parent=5 // pred_check_branch
        %117 = sbr.rel (%p114) target = $region12
      $region11: #{tpu_custom_call.1} parent=5 // pred_region
        %s118 = ssub.s32 %s15, 1
        // Predicated region
        $region13: #{tpu_custom_call.1} parent=11 // pred_check
          %p119 = pneg %p48
        $region14: #{tpu_custom_call.1} parent=11 // pred_check_branch
          %121 = sbr.rel (%p119) target = $region16
        $region15: #{tpu_custom_call.1} parent=11 // pred_region
          %123 = vsyncadd [#allocation3], 0
          %s125 = sshll.u32 %s0, 4
          %s126 = int_to_ptr.hbm [resolvable:$true] %s125
          %s127 = sshll.u32 [#allocation2], 4
          %s128 = int_to_ptr.vmem [resolvable:$true] %s127
          %130 = dma.hbm_to_vmem [thread:$0]  %s126, 128, %s128, [#allocation3]
        $region16: #{tpu_custom_call.1} parent=11 // pred_fallthru
          _
      $region12: #{tpu_custom_call.1} parent=5 // pred_fallthru
        _
      %p131 = scmp.lt.s32.totalorder %s15, 2
      // Predicated region
      $region17: #{tpu_custom_call.1} parent=5 // pred_check
        %p132 = pneg %p131
      $region18: #{tpu_custom_call.1} parent=5 // pred_check_branch
        %134 = sbr.rel (%p132) target = $region20
      $region19: #{tpu_custom_call.1} parent=5 // pred_region
        // Predicated region
        $region21: #{tpu_custom_call.1} parent=19 // pred_check
          %p135 = pneg %p70
        $region22: #{tpu_custom_call.1} parent=19 // pred_check_branch
          %137 = sbr.rel (%p135) target = $region24
        $region23: #{tpu_custom_call.1} parent=19 // pred_region
          %s138 = sand.u32 %s60, 1
          %s139 = scalar_lea.sflag [#allocation6], %s138
          %s140 = sand.u32 %s60, 1
          %s141 = smul.addr %s140, 8
          %s142 = scalar_lea.vmem [#allocation5], %s141
          %144 = vsyncadd %s139, 0
          %s145 = sadd.s32 %s23, %s22
          %s146 = smul.addr %s145, 8
          %s147 = scalar_lea.hbm %s1, %s146
          %s149 = sshll.u32 %s147, 4
          %s150 = int_to_ptr.hbm [resolvable:$true] %s149
          %s151 = sshll.u32 %s142, 4
          %s152 = int_to_ptr.vmem [resolvable:$true] %s151
          %154 = dma.hbm_to_vmem [thread:$0]  %s150, 128, %s152, %s139
        $region24: #{tpu_custom_call.1} parent=19 // pred_fallthru
          _
      $region20: #{tpu_custom_call.1} parent=5 // pred_fallthru
        _
      %p155 = scmp.le.s32.totalorder 1, %s15
      %p156 = scmp.lt.s32.totalorder %s15, 3
      %p157 = pnand %p155, %p156
      %p158 = pneg %p157
      // Predicated region
      $region25: #{tpu_custom_call.1} parent=5 // pred_check
        _
      $region26: #{tpu_custom_call.1} parent=5 // pred_check_branch
        %160 = sbr.rel (%p157) target = $region28
      $region27: #{tpu_custom_call.1} parent=5 // pred_region
        %s161 = ssub.s32 %s15, 1
        // Predicated region
        $region29: #{tpu_custom_call.1} parent=27 // pred_check
          %p162 = pneg %p48
        $region30: #{tpu_custom_call.1} parent=27 // pred_check_branch
          %164 = sbr.rel (%p162) target = $region32
        $region31: #{tpu_custom_call.1} parent=27 // pred_region
          %166 = dma.done [#allocation3], 128
        $region32: #{tpu_custom_call.1} parent=27 // pred_fallthru
          _
        %s167 = sand.u32 %s63, 1
        %s168 = scalar_lea.sflag [#allocation6], %s167
        %s169 = sand.u32 %s63, 1
        %s170 = smul.addr %s169, 8
        %s171 = scalar_lea.vmem [#allocation5], %s170
        // Predicated region
        $region33: #{tpu_custom_call.1} parent=27 // pred_check
          %p172 = pneg %p76
        $region34: #{tpu_custom_call.1} parent=27 // pred_check_branch
          %174 = sbr.rel (%p172) target = $region36
        $region35: #{tpu_custom_call.1} parent=27 // pred_region
          %176 = dma.done %s168, 128
        $region36: #{tpu_custom_call.1} parent=27 // pred_fallthru
          _
        %p177 = pneg %p48
        %p178 = pneg %p45
        %s179 = sand.u32 %s63, 1
        %s180 = scalar_lea.sflag [#allocation6], %s179
        %s181 = sand.u32 %s63, 1
        %s182 = smul.addr %s181, 8
        %s183 = scalar_lea.vmem [#allocation5], %s182
        %p184 = pneg %p76
        %p185 = pneg %p73
        %p186 = pneg %p104
        %p187 = pneg %p101
        %s188 = sand.u32 %s91, 1
        %s189 = scalar_lea.sflag [#allocation4], %s188
        %s190 = sand.u32 %s91, 1
        %s191 = smul.addr %s190, 8
        %s192 = scalar_lea.vmem [#allocation7], %s191
        %v193 = vld [vmem:[#allocation2] sm:$0xff]
        %v194 = vld [vmem:[%s171] sm:$0xff]
        %vm195 = vcmask 64512
        %v197 = vsel %vm195, %v193, 0
        %199 = vmatpush.msra.mxu0 0.0
        %200 = vmatpush.msra.mxu0 0.0
        %201 = vmatpush.msra.mxu0 0.0
        %202 = vmatpush.msra.mxu0 0.0
        %203 = vmatpush.msra.mxu0 0.0
        %204 = vmatpush.msra.mxu0 0.0
        %205 = vmatpush.msra.mxu0 0.0
        %206 = vmatpush.msra.mxu0 0.0
        %207 = vmatpush.msra.mxu0 0.0
        %208 = vmatpush.msra.mxu0 0.0
        %209 = vmatpush.msra.mxu0 0.0
        %210 = vmatpush.msra.mxu0 0.0
        %211 = vmatpush.msra.mxu0 0.0
        %212 = vmatpush.msra.mxu0 0.0
        %213 = vmatpush.msra.mxu0 0.0
        %214 = vmatpush.msra.mxu0 %v194
        %215 = vmatmul.f32.gmra.mxu0 %v197
        %v216 = vpop.f32.mrf.mxu0
        %v217 = vadd.f32 0.0, %v216
        %218 = vdwg.mxu0
        %219 = vst [vmem:[%s192] sm:$0xff] %v217
        %s220 = sand.u32 %s91, 1
        %s221 = scalar_lea.sflag [#allocation4], %s220
        %s222 = sand.u32 %s91, 1
        %s223 = smul.addr %s222, 8
        %s224 = scalar_lea.vmem [#allocation7], %s223
        // Predicated region
        $region37: #{tpu_custom_call.1} parent=27 // pred_check
          %p225 = pneg %p101
        $region38: #{tpu_custom_call.1} parent=27 // pred_check_branch
          %227 = sbr.rel (%p225) target = $region40
        $region39: #{tpu_custom_call.1} parent=27 // pred_region
          %229 = vsyncadd %s221, 0
          %s230 = sadd.s32 %s25, %s24
          %s231 = smul.addr %s230, 8
          %s232 = scalar_lea.hbm %s2, %s231
          %s234 = sshll.u32 %s224, 4
          %s235 = int_to_ptr.vmem [resolvable:$true] %s234
          %s236 = sshll.u32 %s232, 4
          %s237 = int_to_ptr.hbm [resolvable:$true] %s236
          %239 = dma.vmem_to_hbm [thread:$0]  %s235, 128, %s237, %s221
        $region40: #{tpu_custom_call.1} parent=27 // pred_fallthru
          _
      $region28: #{tpu_custom_call.1} parent=5 // pred_fallthru
        _
      %p240 = scmp.le.s32.totalorder 2, %s15
      // Predicated region
      $region41: #{tpu_custom_call.1} parent=5 // pred_check
        %p241 = pneg %p240
      $region42: #{tpu_custom_call.1} parent=5 // pred_check_branch
        %243 = sbr.rel (%p241) target = $region44
      $region43: #{tpu_custom_call.1} parent=5 // pred_region
        %s244 = ssub.s32 %s15, 2
        // Predicated region
        $region45: #{tpu_custom_call.1} parent=43 // pred_check
          %p245 = pneg %p107
        $region46: #{tpu_custom_call.1} parent=43 // pred_check_branch
          %247 = sbr.rel (%p245) target = $region48
        $region47: #{tpu_custom_call.1} parent=43 // pred_region
          %s248 = sand.u32 %s92, 1
          %s249 = scalar_lea.sflag [#allocation4], %s248
          %s250 = sand.u32 %s92, 1
          %s251 = smul.addr %s250, 8
          %s252 = scalar_lea.vmem [#allocation7], %s251
          %254 = dma.done %s249, 128
        $region48: #{tpu_custom_call.1} parent=43 // pred_fallthru
          _
      $region44: #{tpu_custom_call.1} parent=5 // pred_fallthru
        _
    $region6: #{tpu_custom_call.1} parent=1 // loop_footer
      %s19 = sadd.s32 1, %s15
    $region7: #{tpu_custom_call.1} parent=1 // loop_footer_branch
      %14 = sbr.rel target = $region3
    $region8: #{tpu_custom_call.1} parent=1 // loop_exit
      _
    %255 = vsyncpa [#allocation3], 1
    %s256 = scalar_lea.sflag [#allocation3], 1
    %257 = vsyncpa %s256, 1
    %258 = vsyncpa [#allocation6], 1
    %s259 = scalar_lea.sflag [#allocation6], 1
    %260 = vsyncpa %s259, 1
    %261 = vsyncpa [#allocation4], 1
    %s262 = scalar_lea.sflag [#allocation4], 1
    %263 = vsyncpa %s262, 1

</llo_original>
